<compile_context>
chip_gen: v7x
topology: tpu7x:2x2x1
jax: 0.10.0
libtpu: 0.0.40
codegen_flags: <defaults>
</compile_context>

<pallas_src>
import jax
import jax.numpy as jnp
from jax.experimental import pallas as pl
from jax.experimental.pallas import tpu as pltpu

OUT_PAD = 128  # lane-dense output width (>= 10, multiple of 128)


def logistic_kernel(x_ref, w_ref, b_ref, o_ref):
    # x_ref: (TB, IN_PAD)  w_ref: (IN_PAD, OUT_PAD)  b_ref: (1, OUT_PAD)
    # o_ref: (TB, OUT_PAD)
    z = jnp.dot(x_ref[...], w_ref[...], preferred_element_type=jnp.float32)
    z = z + b_ref[...]                       # bias broadcast over batch tile
    o_ref[...] = jax.nn.sigmoid(z).astype(o_ref.dtype)


def logistic_forward(x, w, b, *, tb_max=512):
    """Forward pass y = sigmoid(x @ W.T + b).

    x: (B, IN) f32, w: (OUT, IN) f32 (nn.Linear layout), b: (OUT,) f32
    returns (B, OUT) f32.
    """
    B, IN = x.shape
    OUT = w.shape[0]

    # Pad contraction dim to a multiple of 128 lanes (zeros -> dot unchanged).
    IN_PAD = pl.cdiv(IN, 128) * 128
    # Pad weight/bias to a lane-dense 128-wide output slab (zeros in pad lanes).
    w_t = (
        jnp.zeros((IN_PAD, OUT_PAD), jnp.float32)
        .at[:IN, :OUT]
        .set(w.T.astype(jnp.float32))
    )
    b2 = jnp.zeros((1, OUT_PAD), jnp.float32).at[0, :OUT].set(b.astype(jnp.float32))

    # Batch tile: multiple of 8 sublanes, capped so double-buffered tiles stay
    # comfortably inside scoped VMEM on all generations.
    TB = min(tb_max, max(8, ((B + 7) // 8) * 8))
    B_pad = pl.cdiv(B, TB) * TB

    x_p = x.astype(jnp.float32)
    if B_pad != B or IN_PAD != IN:
        x_p = jnp.pad(x_p, ((0, B_pad - B), (0, IN_PAD - IN)))

    out = pl.pallas_call(
        logistic_kernel,
        out_shape=jax.ShapeDtypeStruct((B_pad, OUT_PAD), jnp.float32),
        grid_spec=pltpu.PrefetchScalarGridSpec(
            num_scalar_prefetch=0,
            grid=(B_pad // TB,),
            in_specs=[
                pl.BlockSpec((TB, IN_PAD), lambda i: (i, 0)),      # x: streamed per tile
                pl.BlockSpec((IN_PAD, OUT_PAD), lambda i: (0, 0)), # W: resident in VMEM
                pl.BlockSpec((1, OUT_PAD), lambda i: (0, 0)),      # b: resident in VMEM
            ],
            out_specs=pl.BlockSpec((TB, OUT_PAD), lambda i: (i, 0)),
        ),
        compiler_params=pltpu.CompilerParams(
            dimension_semantics=("parallel",),  # shard batch tiles across TCs (v7x)
            vmem_limit_bytes=64 * 1024 * 1024,
        ),
    )(x_p, w_t, b2)

    # Slice back to the logical shape (drop batch padding and pad lanes).
    return out[:B, :OUT]


if __name__ == "__main__":
    IN_CHANNELS, OUT_CHANNELS = 784, 10
    BATCH = 8

    key = jax.random.PRNGKey(0)
    kx, kw, kb = jax.random.split(key, 3)

    # Deterministic parameter init mirroring nn.Linear's U(-1/sqrt(in), 1/sqrt(in)).
    bound = 1.0 / (IN_CHANNELS ** 0.5)
    w = jax.random.uniform(kw, (OUT_CHANNELS, IN_CHANNELS), jnp.float32, -bound, bound)
    b = jax.random.uniform(kb, (OUT_CHANNELS,), jnp.float32, -bound, bound)
    x = jax.random.normal(kx, (BATCH, IN_CHANNELS), jnp.float32)

    out = logistic_forward(x, w, b)
    out = jax.block_until_ready(out)

    # Reference check against plain JAX.
    ref = jax.nn.sigmoid(x @ w.T + b[None, :])
    assert out.shape == (BATCH, OUT_CHANNELS)
    assert jnp.allclose(out, ref, atol=1e-5, rtol=1e-5)

    print("KERNEL_OK")
</pallas_src>

<mosaic_0001>
module attributes {stable_mosaic.version = 11 : i64} {
  func.func @logistic_kernel(%arg0: i32, %arg1: memref<8x896xf32, #tpu.memory_space<vmem>>, %arg2: memref<896x128xf32, #tpu.memory_space<vmem>>, %arg3: memref<1x128xf32, #tpu.memory_space<vmem>>, %arg4: memref<8x128xf32, #tpu.memory_space<vmem>>) attributes {dimension_semantics = [#tpu.dimension_semantics<parallel>], iteration_bounds = array<i64: 1>, scalar_prefetch = 0 : i64, scratch_operands = 0 : i64, tpu.core_type = #tpu.core_type<tc>, window_params = [{transform_indices = @transform_0, window_bounds = array<i64: 8, 896>}, {pipeline_mode = #tpu.pipeline_mode<synchronous>, transform_indices = @transform_1, window_bounds = array<i64: 896, 128>}, {pipeline_mode = #tpu.pipeline_mode<synchronous>, transform_indices = @transform_2, window_bounds = array<i64: 1, 128>}, {transform_indices = @transform_3, window_bounds = array<i64: 8, 128>}]} {
    %c0 = arith.constant 0 : index
    %c0_0 = arith.constant 0 : index
    %0 = vector.load %arg1[%c0, %c0_0] : memref<8x896xf32, #tpu.memory_space<vmem>>, vector<8x896xf32>
    %c0_1 = arith.constant 0 : index
    %c0_2 = arith.constant 0 : index
    %1 = vector.load %arg2[%c0_1, %c0_2] : memref<896x128xf32, #tpu.memory_space<vmem>>, vector<896x128xf32>
    %cst = arith.constant dense<0.000000e+00> : vector<8x128xf32>
    %2 = tpu.matmul %0, %1, %cst {dimension_numbers = #tpu.dot_dimension_numbers<[1], [0], [0], [1], [0, 0, 1, 1], [], []>} : vector<8x896xf32>, vector<896x128xf32>, vector<8x128xf32> -> vector<8x128xf32>
    %c0_3 = arith.constant 0 : index
    %c0_4 = arith.constant 0 : index
    %3 = vector.load %arg3[%c0_3, %c0_4] : memref<1x128xf32, #tpu.memory_space<vmem>>, vector<1x128xf32>
    %4 = vector.broadcast %3 : vector<1x128xf32> to vector<8x128xf32>
    %5 = arith.addf %2, %4 : vector<8x128xf32>
    %6 = arith.negf %5 : vector<8x128xf32>
    %7 = math.exp %6 : vector<8x128xf32>
    %cst_5 = arith.constant 1.000000e+00 : f32
    %8 = vector.broadcast %cst_5 : f32 to vector<8x128xf32>
    %9 = arith.addf %8, %7 : vector<8x128xf32>
    %10 = arith.divf %8, %9 : vector<8x128xf32>
    %c0_6 = arith.constant 0 : index
    %c0_7 = arith.constant 0 : index
    %11 = vector.load %arg4[%c0_6, %c0_7] : memref<8x128xf32, #tpu.memory_space<vmem>>, vector<8x128xf32>
    tpu.vector_store %arg4[%c0_6, %c0_7], %10 {strides = array<i32>} : memref<8x128xf32, #tpu.memory_space<vmem>>, vector<8x128xf32>,
    return
  }
  func.func @transform_0(%arg0: i32) -> (i32, i32) {
    %c0_i32 = arith.constant 0 : i32
    %c0_i32_0 = arith.constant 0 : i32
    return %arg0, %c0_i32 : i32, i32
  }
  func.func @transform_1(%arg0: i32) -> (i32, i32) {
    %c0_i32 = arith.constant 0 : i32
    %c0_i32_0 = arith.constant 0 : i32
    %c0_i32_1 = arith.constant 0 : i32
    return %c0_i32, %c0_i32_0 : i32, i32
  }
  func.func @transform_2(%arg0: i32) -> (i32, i32) {
    %c0_i32 = arith.constant 0 : i32
    %c0_i32_0 = arith.constant 0 : i32
    %c0_i32_1 = arith.constant 0 : i32
    return %c0_i32, %c0_i32_0 : i32, i32
  }
  func.func @transform_3(%arg0: i32) -> (i32, i32) {
    %c0_i32 = arith.constant 0 : i32
    %c0_i32_0 = arith.constant 0 : i32
    return %arg0, %c0_i32 : i32, i32
  }
}

</mosaic_0001>

<llo_original>
// kernel: tpu_custom_call.1
$region0: #{tpu_custom_call.1}
  #allocation0 [shape = 'u32[]', space=smem, size = 0x4, offset = 0x4, fixed_abs, tag = 'smem constant byte address 0x4 - core index']
  #allocation1 [shape = 'u32[144,128]{1,0:T(1,128)}', space=vmem, size = 0x12000, scoped, tag = 'internal scratch']
  %s0 = inlined_call_operand.hbm [shape: f32[8,896], index: 0, kind: input, shape index: {}]
  %s1 = inlined_call_operand.hbm [shape: f32[896,128], index: 1, kind: input, shape index: {}]
  %s2 = inlined_call_operand.hbm [shape: f32[1,128], index: 2, kind: input, shape index: {}]
  %s3 = inlined_call_operand.hbm [shape: f32[8,128], index: 3, kind: output, shape index: {}]
  %s4 = sld [smem:[#allocation0]]
  $region34: #{tpu_custom_call.1} parent=0
    _
  %s6 = ssub.s32 1, %s4
  %s7 = scalar_select 0, %s6, %s4
  $region1: #{tpu_custom_call.1} parent=0
    #allocation2 [shape = 'u8[28672]{0}', space=vmem, size = 0x7000, scoped, tag = 'input window, operand 0, single buffered']
    #allocation3 [shape = 's32[1]{0}', space=sflag, size = 0x4, scoped, tag = 'scoped memory for tpu_custom_call.1']
    #allocation4 [shape = 's32[1]{0}', space=sflag, size = 0x4, scoped, tag = 'scoped memory for tpu_custom_call.1']
    #allocation5 [shape = 'u8[458752]{0}', space=vmem, size = 0x70000, scoped, tag = 'input window, operand 1, single buffered']
    #allocation6 [shape = 's32[1]{0}', space=sflag, size = 0x4, scoped, tag = 'scoped memory for tpu_custom_call.1']
    #allocation7 [shape = 'u8[512]{0}', space=vmem, size = 0x400, scoped, tag = 'input window, operand 2, single buffered']
    #allocation8 [shape = 'u8[4096]{0}', space=vmem, size = 0x1000, scoped, tag = 'output window, operand 0, single buffered']
    %8 = vsyncpa [#allocation3], 0
    %9 = vsyncpa [#allocation6], 0
    %10 = vsyncpa [#allocation4], 0
    // Predicated region
    $region2: #{tpu_custom_call.1} parent=1 // pred_check
      _
    $region3: #{tpu_custom_call.1} parent=1 // pred_check_branch
      %12 = sbr.rel (0) target = $region5
    $region4: #{tpu_custom_call.1} parent=1 // pred_region
      %s14 = ssub.s32 896, 896
      %15 = vsyncadd [#allocation3], %s14
      %s17 = sshll.u32 [#allocation2], 4
      %s18 = int_to_ptr.vmem [resolvable:$true] %s17
      %20 = dma.hbm_to_vmem [thread:$0]  %s0, 896, %s18, [#allocation3]
    $region5: #{tpu_custom_call.1} parent=1 // pred_fallthru
      _
    // Predicated region
    $region6: #{tpu_custom_call.1} parent=1 // pred_check
      _
    $region7: #{tpu_custom_call.1} parent=1 // pred_check_branch
      %22 = sbr.rel (0) target = $region9
    $region8: #{tpu_custom_call.1} parent=1 // pred_region
      %s24 = ssub.s32 14336, 14336
      %25 = vsyncadd [#allocation6], %s24
      %s26 = sshll.u32 [#allocation5], 4
      %s27 = int_to_ptr.vmem [resolvable:$true] %s26
      %32 = dma.hbm_to_vmem [thread:$0]  %s1, 14336, %s27, [#allocation6], 128, 128, 8
    $region9: #{tpu_custom_call.1} parent=1 // pred_fallthru
      _
    // Predicated region
    $region10: #{tpu_custom_call.1} parent=1 // pred_check
      _
    $region11: #{tpu_custom_call.1} parent=1 // pred_check_branch
      %34 = sbr.rel (0) target = $region13
    $region12: #{tpu_custom_call.1} parent=1 // pred_region
      %s36 = ssub.s32 16, 16
      %37 = vsyncadd [#allocation6], %s36
      %s39 = sshll.u32 [#allocation7], 4
      %s40 = int_to_ptr.vmem [resolvable:$true] %s39
      %42 = dma.hbm_to_vmem [thread:$0]  %s2, 16, %s40, [#allocation6]
    $region13: #{tpu_custom_call.1} parent=1 // pred_fallthru
      _
    // Predicated region
    $region14: #{tpu_custom_call.1} parent=1 // pred_check
      _
    $region15: #{tpu_custom_call.1} parent=1 // pred_check_branch
      %44 = sbr.rel (0) target = $region17
    $region16: #{tpu_custom_call.1} parent=1 // pred_region
      %45 = dma.done [#allocation3], 896
    $region17: #{tpu_custom_call.1} parent=1 // pred_fallthru
      _
    // Predicated region
    $region18: #{tpu_custom_call.1} parent=1 // pred_check
      _
    $region19: #{tpu_custom_call.1} parent=1 // pred_check_branch
      %47 = sbr.rel (0) target = $region21
    $region20: #{tpu_custom_call.1} parent=1 // pred_region
      %48 = dma.done [#allocation6], 14336
    $region21: #{tpu_custom_call.1} parent=1 // pred_fallthru
      _
    // Predicated region
    $region22: #{tpu_custom_call.1} parent=1 // pred_check
      _
    $region23: #{tpu_custom_call.1} parent=1 // pred_check_branch
      %50 = sbr.rel (0) target = $region25
    $region24: #{tpu_custom_call.1} parent=1 // pred_region
      %51 = dma.done [#allocation6], 16
    $region25: #{tpu_custom_call.1} parent=1 // pred_fallthru
      _
    %v52 = vld [vmem:[#allocation2] sm:$0xff]
    %v53 = vld [vmem:[#allocation2 + $0x8] sm:$0xff]
    %v54 = vld [vmem:[#allocation2 + $0x10] sm:$0xff]
    %v55 = vld [vmem:[#allocation2 + $0x18] sm:$0xff]
    %v56 = vld [vmem:[#allocation2 + $0x20] sm:$0xff]
    %v57 = vld [vmem:[#allocation2 + $0x28] sm:$0xff]
    %v58 = vld [vmem:[#allocation2 + $0x30] sm:$0xff]
    %v59 = vld [vmem:[#allocation5] sm:$0xff]
    %v60 = vld [vmem:[#allocation5 + $0x8] sm:$0xff]
    %v61 = vld [vmem:[#allocation5 + $0x10] sm:$0xff]
    %v62 = vld [vmem:[#allocation5 + $0x18] sm:$0xff]
    %v63 = vld [vmem:[#allocation5 + $0x20] sm:$0xff]
    %v64 = vld [vmem:[#allocation5 + $0x28] sm:$0xff]
    %v65 = vld [vmem:[#allocation5 + $0x30] sm:$0xff]
    %v66 = vld [vmem:[#allocation5 + $0x38] sm:$0xff]
    %v67 = vld [vmem:[#allocation5 + $0x40] sm:$0xff]
    %v68 = vld [vmem:[#allocation5 + $0x48] sm:$0xff]
    %v69 = vld [vmem:[#allocation5 + $0x50] sm:$0xff]
    %v70 = vld [vmem:[#allocation5 + $0x58] sm:$0xff]
    %v71 = vld [vmem:[#allocation5 + $0x60] sm:$0xff]
    %v72 = vld [vmem:[#allocation5 + $0x68] sm:$0xff]
    %v73 = vld [vmem:[#allocation5 + $0x70] sm:$0xff]
    %v74 = vld [vmem:[#allocation5 + $0x78] sm:$0xff]
    %v75 = vld [vmem:[#allocation5 + $0x80] sm:$0xff]
    %v76 = vld [vmem:[#allocation5 + $0x88] sm:$0xff]
    %v77 = vld [vmem:[#allocation5 + $0x90] sm:$0xff]
    %v78 = vld [vmem:[#allocation5 + $0x98] sm:$0xff]
    %v79 = vld [vmem:[#allocation5 + $0xa0] sm:$0xff]
    %v80 = vld [vmem:[#allocation5 + $0xa8] sm:$0xff]
    %v81 = vld [vmem:[#allocation5 + $0xb0] sm:$0xff]
    %v82 = vld [vmem:[#allocation5 + $0xb8] sm:$0xff]
    %v83 = vld [vmem:[#allocation5 + $0xc0] sm:$0xff]
    %v84 = vld [vmem:[#allocation5 + $0xc8] sm:$0xff]
    %v85 = vld [vmem:[#allocation5 + $0xd0] sm:$0xff]
    %v86 = vld [vmem:[#allocation5 + $0xd8] sm:$0xff]
    %v87 = vld [vmem:[#allocation5 + $0xe0] sm:$0xff]
    %v88 = vld [vmem:[#allocation5 + $0xe8] sm:$0xff]
    %v89 = vld [vmem:[#allocation5 + $0xf0] sm:$0xff]
    %v90 = vld [vmem:[#allocation5 + $0xf8] sm:$0xff]
    %v91 = vld [vmem:[#allocation5 + $0x100] sm:$0xff]
    %v92 = vld [vmem:[#allocation5 + $0x108] sm:$0xff]
    %v93 = vld [vmem:[#allocation5 + $0x110] sm:$0xff]
    %v94 = vld [vmem:[#allocation5 + $0x118] sm:$0xff]
    %v95 = vld [vmem:[#allocation5 + $0x120] sm:$0xff]
    %v96 = vld [vmem:[#allocation5 + $0x128] sm:$0xff]
    %v97 = vld [vmem:[#allocation5 + $0x130] sm:$0xff]
    %v98 = vld [vmem:[#allocation5 + $0x138] sm:$0xff]
    %v99 = vld [vmem:[#allocation5 + $0x140] sm:$0xff]
    %v100 = vld [vmem:[#allocation5 + $0x148] sm:$0xff]
    %v101 = vld [vmem:[#allocation5 + $0x150] sm:$0xff]
    %v102 = vld [vmem:[#allocation5 + $0x158] sm:$0xff]
    %v103 = vld [vmem:[#allocation5 + $0x160] sm:$0xff]
    %v104 = vld [vmem:[#allocation5 + $0x168] sm:$0xff]
    %v105 = vld [vmem:[#allocation5 + $0x170] sm:$0xff]
    %v106 = vld [vmem:[#allocation5 + $0x178] sm:$0xff]
    %v107 = vld [vmem:[#allocation5 + $0x180] sm:$0xff]
    %v108 = vld [vmem:[#allocation5 + $0x188] sm:$0xff]
    %v109 = vld [vmem:[#allocation5 + $0x190] sm:$0xff]
    %v110 = vld [vmem:[#allocation5 + $0x198] sm:$0xff]
    %v111 = vld [vmem:[#allocation5 + $0x1a0] sm:$0xff]
    %v112 = vld [vmem:[#allocation5 + $0x1a8] sm:$0xff]
    %v113 = vld [vmem:[#allocation5 + $0x1b0] sm:$0xff]
    %v114 = vld [vmem:[#allocation5 + $0x1b8] sm:$0xff]
    %v115 = vld [vmem:[#allocation5 + $0x1c0] sm:$0xff]
    %v116 = vld [vmem:[#allocation5 + $0x1c8] sm:$0xff]
    %v117 = vld [vmem:[#allocation5 + $0x1d0] sm:$0xff]
    %v118 = vld [vmem:[#allocation5 + $0x1d8] sm:$0xff]
    %v119 = vld [vmem:[#allocation5 + $0x1e0] sm:$0xff]
    %v120 = vld [vmem:[#allocation5 + $0x1e8] sm:$0xff]
    %v121 = vld [vmem:[#allocation5 + $0x1f0] sm:$0xff]
    %v122 = vld [vmem:[#allocation5 + $0x1f8] sm:$0xff]
    %v123 = vld [vmem:[#allocation5 + $0x200] sm:$0xff]
    %v124 = vld [vmem:[#allocation5 + $0x208] sm:$0xff]
    %v125 = vld [vmem:[#allocation5 + $0x210] sm:$0xff]
    %v126 = vld [vmem:[#allocation5 + $0x218] sm:$0xff]
    %v127 = vld [vmem:[#allocation5 + $0x220] sm:$0xff]
    %v128 = vld [vmem:[#allocation5 + $0x228] sm:$0xff]
    %v129 = vld [vmem:[#allocation5 + $0x230] sm:$0xff]
    %v130 = vld [vmem:[#allocation5 + $0x238] sm:$0xff]
    %v131 = vld [vmem:[#allocation5 + $0x240] sm:$0xff]
    %v132 = vld [vmem:[#allocation5 + $0x248] sm:$0xff]
    %v133 = vld [vmem:[#allocation5 + $0x250] sm:$0xff]
    %v134 = vld [vmem:[#allocation5 + $0x258] sm:$0xff]
    %v135 = vld [vmem:[#allocation5 + $0x260] sm:$0xff]
    %v136 = vld [vmem:[#allocation5 + $0x268] sm:$0xff]
    %v137 = vld [vmem:[#allocation5 + $0x270] sm:$0xff]
    %v138 = vld [vmem:[#allocation5 + $0x278] sm:$0xff]
    %v139 = vld [vmem:[#allocation5 + $0x280] sm:$0xff]
    %v140 = vld [vmem:[#allocation5 + $0x288] sm:$0xff]
    %v141 = vld [vmem:[#allocation5 + $0x290] sm:$0xff]
    %v142 = vld [vmem:[#allocation5 + $0x298] sm:$0xff]
    %v143 = vld [vmem:[#allocation5 + $0x2a0] sm:$0xff]
    %v144 = vld [vmem:[#allocation5 + $0x2a8] sm:$0xff]
    %v145 = vld [vmem:[#allocation5 + $0x2b0] sm:$0xff]
    %v146 = vld [vmem:[#allocation5 + $0x2b8] sm:$0xff]
    %v147 = vld [vmem:[#allocation5 + $0x2c0] sm:$0xff]
    %v148 = vld [vmem:[#allocation5 + $0x2c8] sm:$0xff]
    %v149 = vld [vmem:[#allocation5 + $0x2d0] sm:$0xff]
    %v150 = vld [vmem:[#allocation5 + $0x2d8] sm:$0xff]
    %v151 = vld [vmem:[#allocation5 + $0x2e0] sm:$0xff]
    %v152 = vld [vmem:[#allocation5 + $0x2e8] sm:$0xff]
    %v153 = vld [vmem:[#allocation5 + $0x2f0] sm:$0xff]
    %v154 = vld [vmem:[#allocation5 + $0x2f8] sm:$0xff]
    %v155 = vld [vmem:[#allocation5 + $0x300] sm:$0xff]
    %v156 = vld [vmem:[#allocation5 + $0x308] sm:$0xff]
    %v157 = vld [vmem:[#allocation5 + $0x310] sm:$0xff]
    %v158 = vld [vmem:[#allocation5 + $0x318] sm:$0xff]
    %v159 = vld [vmem:[#allocation5 + $0x320] sm:$0xff]
    %v160 = vld [vmem:[#allocation5 + $0x328] sm:$0xff]
    %v161 = vld [vmem:[#allocation5 + $0x330] sm:$0xff]
    %v162 = vld [vmem:[#allocation5 + $0x338] sm:$0xff]
    %v163 = vld [vmem:[#allocation5 + $0x340] sm:$0xff]
    %v164 = vld [vmem:[#allocation5 + $0x348] sm:$0xff]
    %v165 = vld [vmem:[#allocation5 + $0x350] sm:$0xff]
    %v166 = vld [vmem:[#allocation5 + $0x358] sm:$0xff]
    %v167 = vld [vmem:[#allocation5 + $0x360] sm:$0xff]
    %v168 = vld [vmem:[#allocation5 + $0x368] sm:$0xff]
    %v169 = vld [vmem:[#allocation5 + $0x370] sm:$0xff]
    %v170 = vld [vmem:[#allocation5 + $0x378] sm:$0xff]
    %v171 = vld [vmem:[#allocation7] sm:$0x1]
    %v173 = vlaneseq
    %v174 = vshrl.u32 %v173, 7
    %v175 = vsub.s32 0, %v174
    %v176 = vrot.slane %v171, %v175
    %178 = vmatprep.subr.mxu0 0.0
    %179 = vmatpush1.msra.mxu0 %v59
    %180 = vmatprep.subr.mxu0 0.0
    %181 = vmatpush1.msra.mxu0 %v60
    %182 = vmatprep.subr.mxu0 0.0
    %183 = vmatpush1.msra.mxu0 %v61
    %184 = vmatprep.subr.mxu0 0.0
    %185 = vmatpush1.msra.mxu0 %v62
    %186 = vmatprep.subr.mxu0 0.0
    %187 = vmatpush1.msra.mxu0 %v63
    %188 = vmatprep.subr.mxu0 0.0
    %189 = vmatpush1.msra.mxu0 %v64
    %190 = vmatprep.subr.mxu0 0.0
    %191 = vmatpush1.msra.mxu0 %v65
    %192 = vmatprep.subr.mxu0 0.0
    %193 = vmatpush1.msra.mxu0 %v66
    %194 = vmatprep.subr.mxu0 0.0
    %195 = vmatpush1.msra.mxu0 %v67
    %196 = vmatprep.subr.mxu0 0.0
    %197 = vmatpush1.msra.mxu0 %v68
    %198 = vmatprep.subr.mxu0 0.0
    %199 = vmatpush1.msra.mxu0 %v69
    %200 = vmatprep.subr.mxu0 0.0
    %201 = vmatpush1.msra.mxu0 %v70
    %202 = vmatprep.subr.mxu0 0.0
    %203 = vmatpush1.msra.mxu0 %v71
    %204 = vmatprep.subr.mxu0 0.0
    %205 = vmatpush1.msra.mxu0 %v72
    %206 = vmatprep.subr.mxu0 0.0
    %207 = vmatpush1.msra.mxu0 %v73
    %208 = vmatprep.subr.mxu0 0.0
    %209 = vmatpush1.msra.mxu0 %v74
    %210 = vmatprep.subr.mxu0 0.0
    %211 = vmatpush1.msra.mxu0 %v75
    %212 = vmatprep.subr.mxu0 0.0
    %213 = vmatpush1.msra.mxu0 %v76
    %214 = vmatprep.subr.mxu0 0.0
    %215 = vmatpush1.msra.mxu0 %v77
    %216 = vmatprep.subr.mxu0 0.0
    %217 = vmatpush1.msra.mxu0 %v78
    %218 = vmatprep.subr.mxu0 0.0
    %219 = vmatpush1.msra.mxu0 %v79
    %220 = vmatprep.subr.mxu0 0.0
    %221 = vmatpush1.msra.mxu0 %v80
    %222 = vmatprep.subr.mxu0 0.0
    %223 = vmatpush1.msra.mxu0 %v81
    %224 = vmatprep.subr.mxu0 0.0
    %225 = vmatpush1.msra.mxu0 %v82
    %226 = vmatprep.subr.mxu0 0.0
    %227 = vmatpush1.msra.mxu0 %v83
    %228 = vmatprep.subr.mxu0 0.0
    %229 = vmatpush1.msra.mxu0 %v84
    %230 = vmatprep.subr.mxu0 0.0
    %231 = vmatpush1.msra.mxu0 %v85
    %232 = vmatprep.subr.mxu0 0.0
    %233 = vmatpush1.msra.mxu0 %v86
    %234 = vmatprep.subr.mxu0 0.0
    %235 = vmatpush1.msra.mxu0 %v87
    %236 = vmatprep.subr.mxu0 0.0
    %237 = vmatpush1.msra.mxu0 %v88
    %238 = vmatprep.subr.mxu0 0.0
    %239 = vmatpush1.msra.mxu0 %v89
    %240 = vmatprep.subr.mxu0 0.0
    %241 = vmatpush1.msra.mxu0 %v90
    %242 = vmatprep.mubr.f32.mxu0 %v53
    %243 = vmatmul.mubr.f32.gmra.mrb[0].mxu0 %v52
    %v244 = vpop.f32.mrb[0].mxu0
    %v245 = vadd.f32 %v176, %v244
    %v246 = vpop.f32.mrb[0].mxu0
    %247 = vdwg.mxu0
    %248 = vmatprep.subr.mxu0 0.0
    %249 = vmatpush1.msra.mxu0 %v91
    %250 = vmatprep.subr.mxu0 0.0
    %251 = vmatpush1.msra.mxu0 %v92
    %252 = vmatprep.subr.mxu0 0.0
    %253 = vmatpush1.msra.mxu0 %v93
    %254 = vmatprep.subr.mxu0 0.0
    %255 = vmatpush1.msra.mxu0 %v94
    %256 = vmatprep.subr.mxu0 0.0
    %257 = vmatpush1.msra.mxu0 %v95
    %258 = vmatprep.subr.mxu0 0.0
    %259 = vmatpush1.msra.mxu0 %v96
    %260 = vmatprep.subr.mxu0 0.0
    %261 = vmatpush1.msra.mxu0 %v97
    %262 = vmatprep.subr.mxu0 0.0
    %263 = vmatpush1.msra.mxu0 %v98
    %264 = vmatprep.subr.mxu0 0.0
    %265 = vmatpush1.msra.mxu0 %v99
    %266 = vmatprep.subr.mxu0 0.0
    %267 = vmatpush1.msra.mxu0 %v100
    %268 = vmatprep.subr.mxu0 0.0
    %269 = vmatpush1.msra.mxu0 %v101
    %270 = vmatprep.subr.mxu0 0.0
    %271 = vmatpush1.msra.mxu0 %v102
    %272 = vmatprep.subr.mxu0 0.0
    %273 = vmatpush1.msra.mxu0 %v103
    %274 = vmatprep.subr.mxu0 0.0
    %275 = vmatpush1.msra.mxu0 %v104
    %276 = vmatprep.subr.mxu0 0.0
    %277 = vmatpush1.msra.mxu0 %v105
    %278 = vmatprep.subr.mxu0 0.0
    %279 = vmatpush1.msra.mxu0 %v106
    %280 = vmatprep.subr.mxu0 0.0
    %281 = vmatpush1.msra.mxu0 %v107
    %282 = vmatprep.subr.mxu0 0.0
    %283 = vmatpush1.msra.mxu0 %v108
    %284 = vmatprep.subr.mxu0 0.0
    %285 = vmatpush1.msra.mxu0 %v109
    %286 = vmatprep.subr.mxu0 0.0
    %287 = vmatpush1.msra.mxu0 %v110
    %288 = vmatprep.subr.mxu0 0.0
    %289 = vmatpush1.msra.mxu0 %v111
    %290 = vmatprep.subr.mxu0 0.0
    %291 = vmatpush1.msra.mxu0 %v112
    %292 = vmatprep.subr.mxu0 0.0
    %293 = vmatpush1.msra.mxu0 %v113
    %294 = vmatprep.subr.mxu0 0.0
    %295 = vmatpush1.msra.mxu0 %v114
    %296 = vmatprep.subr.mxu0 0.0
    %297 = vmatpush1.msra.mxu0 %v115
    %298 = vmatprep.subr.mxu0 0.0
    %299 = vmatpush1.msra.mxu0 %v116
    %300 = vmatprep.subr.mxu0 0.0
    %301 = vmatpush1.msra.mxu0 %v117
    %302 = vmatprep.subr.mxu0 0.0
    %303 = vmatpush1.msra.mxu0 %v118
    %304 = vmatprep.subr.mxu0 0.0
    %305 = vmatpush1.msra.mxu0 %v119
    %306 = vmatprep.subr.mxu0 0.0
    %307 = vmatpush1.msra.mxu0 %v120
    %308 = vmatprep.subr.mxu0 0.0
    %309 = vmatpush1.msra.mxu0 %v121
    %310 = vmatprep.subr.mxu0 0.0
    %311 = vmatpush1.msra.mxu0 %v122
    %312 = vmatprep.mubr.f32.mxu0 %v55
    %313 = vmatmul.mubr.f32.gmra.mrb[0].mxu0 %v54
    %v314 = vpop.f32.mrb[0].mxu0
    %v315 = vadd.f32 %v245, %v314
    %v316 = vpop.f32.mrb[0].mxu0
    %317 = vdwg.mxu0
    %318 = vmatprep.subr.mxu0 0.0
    %319 = vmatpush1.msra.mxu0 %v123
    %320 = vmatprep.subr.mxu0 0.0
    %321 = vmatpush1.msra.mxu0 %v124
    %322 = vmatprep.subr.mxu0 0.0
    %323 = vmatpush1.msra.mxu0 %v125
    %324 = vmatprep.subr.mxu0 0.0
    %325 = vmatpush1.msra.mxu0 %v126
    %326 = vmatprep.subr.mxu0 0.0
    %327 = vmatpush1.msra.mxu0 %v127
    %328 = vmatprep.subr.mxu0 0.0
    %329 = vmatpush1.msra.mxu0 %v128
    %330 = vmatprep.subr.mxu0 0.0
    %331 = vmatpush1.msra.mxu0 %v129
    %332 = vmatprep.subr.mxu0 0.0
    %333 = vmatpush1.msra.mxu0 %v130
    %334 = vmatprep.subr.mxu0 0.0
    %335 = vmatpush1.msra.mxu0 %v131
    %336 = vmatprep.subr.mxu0 0.0
    %337 = vmatpush1.msra.mxu0 %v132
    %338 = vmatprep.subr.mxu0 0.0
    %339 = vmatpush1.msra.mxu0 %v133
    %340 = vmatprep.subr.mxu0 0.0
    %341 = vmatpush1.msra.mxu0 %v134
    %342 = vmatprep.subr.mxu0 0.0
    %343 = vmatpush1.msra.mxu0 %v135
    %344 = vmatprep.subr.mxu0 0.0
    %345 = vmatpush1.msra.mxu0 %v136
    %346 = vmatprep.subr.mxu0 0.0
    %347 = vmatpush1.msra.mxu0 %v137
    %348 = vmatprep.subr.mxu0 0.0
    %349 = vmatpush1.msra.mxu0 %v138
    %350 = vmatprep.subr.mxu0 0.0
    %351 = vmatpush1.msra.mxu0 %v139
    %352 = vmatprep.subr.mxu0 0.0
    %353 = vmatpush1.msra.mxu0 %v140
    %354 = vmatprep.subr.mxu0 0.0
    %355 = vmatpush1.msra.mxu0 %v141
    %356 = vmatprep.subr.mxu0 0.0
    %357 = vmatpush1.msra.mxu0 %v142
    %358 = vmatprep.subr.mxu0 0.0
    %359 = vmatpush1.msra.mxu0 %v143
    %360 = vmatprep.subr.mxu0 0.0
    %361 = vmatpush1.msra.mxu0 %v144
    %362 = vmatprep.subr.mxu0 0.0
    %363 = vmatpush1.msra.mxu0 %v145
    %364 = vmatprep.subr.mxu0 0.0
    %365 = vmatpush1.msra.mxu0 %v146
    %366 = vmatprep.subr.mxu0 0.0
    %367 = vmatpush1.msra.mxu0 %v147
    %368 = vmatprep.subr.mxu0 0.0
    %369 = vmatpush1.msra.mxu0 %v148
    %370 = vmatprep.subr.mxu0 0.0
    %371 = vmatpush1.msra.mxu0 %v149
    %372 = vmatprep.subr.mxu0 0.0
    %373 = vmatpush1.msra.mxu0 %v150
    %374 = vmatprep.subr.mxu0 0.0
    %375 = vmatpush1.msra.mxu0 %v151
    %376 = vmatprep.subr.mxu0 0.0
    %377 = vmatpush1.msra.mxu0 %v152
    %378 = vmatprep.subr.mxu0 0.0
    %379 = vmatpush1.msra.mxu0 %v153
    %380 = vmatprep.subr.mxu0 0.0
    %381 = vmatpush1.msra.mxu0 %v154
    %382 = vmatprep.mubr.f32.mxu0 %v57
    %383 = vmatmul.mubr.f32.gmra.mrb[0].mxu0 %v56
    %v384 = vpop.f32.mrb[0].mxu0
    %v385 = vadd.f32 %v315, %v384
    %v386 = vpop.f32.mrb[0].mxu0
    %387 = vdwg.mxu0
    %388 = vmatprep.subr.mxu0 0.0
    %389 = vmatpush1.msra.mxu0 %v155
    %390 = vmatprep.subr.mxu0 0.0
    %391 = vmatpush1.msra.mxu0 %v156
    %392 = vmatprep.subr.mxu0 0.0
    %393 = vmatpush1.msra.mxu0 %v157
    %394 = vmatprep.subr.mxu0 0.0
    %395 = vmatpush1.msra.mxu0 %v158
    %396 = vmatprep.subr.mxu0 0.0
    %397 = vmatpush1.msra.mxu0 %v159
    %398 = vmatprep.subr.mxu0 0.0
    %399 = vmatpush1.msra.mxu0 %v160
    %400 = vmatprep.subr.mxu0 0.0
    %401 = vmatpush1.msra.mxu0 %v161
    %402 = vmatprep.subr.mxu0 0.0
    %403 = vmatpush1.msra.mxu0 %v162
    %404 = vmatprep.subr.mxu0 0.0
    %405 = vmatpush1.msra.mxu0 %v163
    %406 = vmatprep.subr.mxu0 0.0
    %407 = vmatpush1.msra.mxu0 %v164
    %408 = vmatprep.subr.mxu0 0.0
    %409 = vmatpush1.msra.mxu0 %v165
    %410 = vmatprep.subr.mxu0 0.0
    %411 = vmatpush1.msra.mxu0 %v166
    %412 = vmatprep.subr.mxu0 0.0
    %413 = vmatpush1.msra.mxu0 %v167
    %414 = vmatprep.subr.mxu0 0.0
    %415 = vmatpush1.msra.mxu0 %v168
    %416 = vmatprep.subr.mxu0 0.0
    %417 = vmatpush1.msra.mxu0 %v169
    %418 = vmatprep.subr.mxu0 0.0
    %419 = vmatpush1.msra.mxu0 %v170
    %420 = vmatprep.subr.mxu0 0.0
    %421 = vmatpush1.msra.mxu0 0.0
    %422 = vmatprep.subr.mxu0 0.0
    %423 = vmatpush1.msra.mxu0 0.0
    %424 = vmatprep.subr.mxu0 0.0
    %425 = vmatpush1.msra.mxu0 0.0
    %426 = vmatprep.subr.mxu0 0.0
    %427 = vmatpush1.msra.mxu0 0.0
    %428 = vmatprep.subr.mxu0 0.0
    %429 = vmatpush1.msra.mxu0 0.0
    %430 = vmatprep.subr.mxu0 0.0
    %431 = vmatpush1.msra.mxu0 0.0
    %432 = vmatprep.subr.mxu0 0.0
    %433 = vmatpush1.msra.mxu0 0.0
    %434 = vmatprep.subr.mxu0 0.0
    %435 = vmatpush1.msra.mxu0 0.0
    %436 = vmatprep.subr.mxu0 0.0
    %437 = vmatpush1.msra.mxu0 0.0
    %438 = vmatprep.subr.mxu0 0.0
    %439 = vmatpush1.msra.mxu0 0.0
    %440 = vmatprep.subr.mxu0 0.0
    %441 = vmatpush1.msra.mxu0 0.0
    %442 = vmatprep.subr.mxu0 0.0
    %443 = vmatpush1.msra.mxu0 0.0
    %444 = vmatprep.subr.mxu0 0.0
    %445 = vmatpush1.msra.mxu0 0.0
    %446 = vmatprep.subr.mxu0 0.0
    %447 = vmatpush1.msra.mxu0 0.0
    %448 = vmatprep.subr.mxu0 0.0
    %449 = vmatpush1.msra.mxu0 0.0
    %450 = vmatprep.subr.mxu0 0.0
    %451 = vmatpush1.msra.mxu0 0.0
    %452 = vmatprep.mubr.f32.mxu0 0.0
    %453 = vmatmul.mubr.f32.gmra.mrb[0].mxu0 %v58
    %v454 = vpop.f32.mrb[0].mxu0
    %v455 = vadd.f32 %v385, %v454
    %v456 = vpop.f32.mrb[0].mxu0
    %457 = vdwg.mxu0
    %v458 = vxor.u32 %v455, 2147483648
    %v459 = vmul.f32 %v458, 1.442695
    %v460 = vpow.pop %v459
    %v461 = vadd.f32 %v460, 1.0
    %v462 = vrcp.pop %v461
    %v463 = vmul.f32 1.0, %v462
    %464 = vst [vmem:[#allocation8] sm:$0xff] %v463
    // Predicated region
    $region26: #{tpu_custom_call.1} parent=1 // pred_check
      _
    $region27: #{tpu_custom_call.1} parent=1 // pred_check_branch
      %466 = sbr.rel (0) target = $region29
    $region28: #{tpu_custom_call.1} parent=1 // pred_region
      %s468 = ssub.s32 128, 128
      %469 = vsyncadd [#allocation4], %s468
      %s471 = sshll.u32 [#allocation8], 4
      %s472 = int_to_ptr.vmem [resolvable:$true] %s471
      %474 = dma.vmem_to_hbm [thread:$0]  %s472, 128, %s3, [#allocation4]
    $region29: #{tpu_custom_call.1} parent=1 // pred_fallthru
      _
    // Predicated region
    $region30: #{tpu_custom_call.1} parent=1 // pred_check
      _
    $region31: #{tpu_custom_call.1} parent=1 // pred_check_branch
      %476 = sbr.rel (0) target = $region33
    $region32: #{tpu_custom_call.1} parent=1 // pred_region
      %477 = dma.done [#allocation4], 128
    $region33: #{tpu_custom_call.1} parent=1 // pred_fallthru
      _
    %478 = vsyncpa [#allocation3], 1
    %479 = vsyncpa [#allocation6], 1
    %480 = vsyncpa [#allocation4], 1

</llo_original>
